<compile_context>
chip_gen: v7x
topology: tpu7x:2x2x1
jax: 0.10.0
libtpu: 0.0.40
codegen_flags: <defaults>
</compile_context>

<pallas_src>
import functools

import jax
import jax.numpy as jnp
from jax.experimental import pallas as pl
from jax.experimental.pallas import tpu as pltpu


def _cdiv(a, b):
    return -(-a // b)


def _round_up(x, m):
    return _cdiv(x, m) * m


# ----------------------------- Pallas kernel ------------------------------ #
def _patch_embed_kernel(x_ref, w_ref, b_ref, o_ref):
    """Single-shot GEMM + bias:  o = x @ w + b.

    Grid = (M/tm,).  The [K, N] weight and [1, N] bias blocks use a constant
    index map, so they stay resident in VMEM across all M tiles.  The bias add
    and the final cast happen on the f32 MXU accumulator (cheap on every
    generation; v5e has no bf16 VPU path anyway).
    """
    o_ref[...] = (
        jnp.dot(x_ref[...], w_ref[...], preferred_element_type=jnp.float32)
        + b_ref[...]
    ).astype(o_ref.dtype)


def _choose_tm(M):
    """Pick the M tile (rows per grid step).

    * >= 4 blocks once each block can still be >= 128 rows: 2 blocks per
      TensorCore on v7x megacore, and enough steps to pipeline DMAs.
    * Otherwise >= 2 blocks when M allows (>= 32 rows).
    * Cap at 1024 rows: amortizes the ~0.35 us per-grid-step overhead while
      keeping per-step VMEM bounded (safe on v7x's 64 MiB).
    * Multiple of 16 rows so the same tile packs cleanly for bf16 (16, 128).
    """
    if M >= 4 * 128:
        return min(1024, _round_up(_cdiv(M, 4), 128))
    if M >= 2 * 16:
        return _round_up(_cdiv(M, 2), 16)
    return _round_up(max(M, 1), 16)


def _matmul_bias(x, w, b, *, tm, out_dtype):
    """x: [M, K], w: [K, N], b: [1, N] -> [M, N].  M must be a multiple of tm."""
    M, K = x.shape
    K2, N = w.shape
    assert K == K2 and b.shape == (1, N)
    assert M % tm == 0

    out_itemsize = jnp.dtype(out_dtype).itemsize
    flops = 2 * M * K * N
    bytes_accessed = (
        M * K * x.dtype.itemsize + K * N * w.dtype.itemsize
        + N * b.dtype.itemsize + M * N * out_itemsize
    )

    # Per-step VMEM: double-buffered streamed operands + resident weight/bias.
    # Only raise the scoped limit when the footprint actually needs it (keeps
    # the conservative per-generation defaults otherwise).
    vmem_need = (2 * tm * K * x.dtype.itemsize + 2 * tm * N * out_itemsize
                 + 2 * K * N * w.dtype.itemsize + 2 * N * b.dtype.itemsize)
    vmem_limit = None
    if vmem_need > 28 * 2**20:
        vmem_limit = int(min(vmem_need + (4 << 20), 64 * 2**20))

    return pl.pallas_call(
        _patch_embed_kernel,
        out_shape=jax.ShapeDtypeStruct((M, N), out_dtype),
        grid_spec=pltpu.PrefetchScalarGridSpec(
            num_scalar_prefetch=0,
            grid=(M // tm,),
            in_specs=[
                # Activations: streamed over M.
                pl.BlockSpec((tm, K), lambda i: (i, 0)),
                # Weight / bias: constant block index -> VMEM-resident across
                # all M steps.
                # TODO(synk): pipeline_mode=pl.Buffered(1) here would drop the
                # dead second buffer (K*N*itemsize) — negligible at these dims,
                # left at the default for lowering safety.
                pl.BlockSpec((K, N), lambda i: (0, 0)),
                pl.BlockSpec((1, N), lambda i: (0, 0)),
            ],
            out_specs=pl.BlockSpec((tm, N), lambda i: (i, 0)),
        ),
        compiler_params=pltpu.CompilerParams(
            dimension_semantics=("parallel",),        # shard M blocks across TCs
            allow_input_fusion=[True, False, False],  # fuse patchify into input
            vmem_limit_bytes=vmem_limit,
        ),
        cost_estimate=pl.CostEstimate(
            flops=flops, transcendentals=0, bytes_accessed=bytes_accessed
        ),
    )(x, w, b)


# ------------------------- jitted forward (glue + kernel) ------------------ #
@functools.partial(
    jax.jit,
    static_argnames=("patch_size", "embed_dim", "compute_dtype", "out_dtype"))
def _patch_embed_forward(x, w2d, b2d, *, patch_size, embed_dim,
                         compute_dtype, out_dtype):
    B, C, H, W = x.shape
    ph = pw = patch_size
    nh, nw = H // ph, W // pw
    P = nh * nw
    Kp, Np = w2d.shape            # padded GEMM dims (multiples of 128)
    K = C * ph * pw               # true contraction size
    out_dtype = out_dtype if out_dtype is not None else x.dtype

    # Cast FIRST (before patchify/pad) so any materialized layout pass moves
    # half the bytes; bf16 MXU with f32 accumulation on all generations.
    if compute_dtype is not None and x.dtype != compute_dtype:
        x = x.astype(compute_dtype)

    # Patch extraction, flattened in (C, kh, kw) order to match Conv2d.
    # [B, C, nh, ph, nw, pw] -> [B, nh, nw, C, ph, pw] -> [B*P, K]
    # With allow_input_fusion on the activation operand, XLA may fuse this
    # transpose (+pad) straight into the pallas_call input DMA instead of
    # materializing xp in HBM.
    # TODO(synk): stronger variant — feed the free reshape [B, C, nh, ph, W]
    # with a multi-dim BlockSpec and do the (C,ph,pw)->K relayout on the idle
    # XLU/VPU slots inside the kernel; kept out-of-kernel here for lowering
    # safety.
    xp = x.reshape(B, C, nh, ph, nw, pw)
    xp = jnp.transpose(xp, (0, 2, 4, 1, 3, 5)).reshape(B * P, K)

    M = B * P
    tm = _choose_tm(M)
    M_pad = _cdiv(M, tm) * tm
    if M_pad != M or Kp != K:
        xp = jnp.pad(xp, ((0, M_pad - M), (0, Kp - K)))

    out = _matmul_bias(xp, w2d, b2d, tm=tm, out_dtype=out_dtype)
    out = out[:M, :embed_dim]

    # [B*P, E] -> [B, num_patches, embed_dim]  (== flatten(2).transpose(1,2))
    return out.reshape(B, P, embed_dim)


# ------------------------------ PatchEmbed -------------------------------- #
class PatchEmbedPallas:
    """Image-to-patch embedding; mirrors the PyTorch module's forward."""

    def __init__(self, img_size=64, patch_size=8, in_chans=4, embed_dim=512,
                 key=None, dtype=jnp.float32,
                 compute_dtype=jnp.bfloat16, out_dtype=None):
        self.img_size = (img_size, img_size)
        self.patch_size = (patch_size, patch_size)
        self.num_patches = (img_size // patch_size) * (img_size // patch_size)
        self.in_chans = in_chans
        self.embed_dim = embed_dim
        self.compute_dtype = compute_dtype   # bf16 MXU path by default
        self.out_dtype = out_dtype           # None -> match input dtype

        if key is None:
            key = jax.random.PRNGKey(0)
        kw, kb = jax.random.split(key)
        # Conv2d weight: [embed_dim, in_chans, ph, pw]; bias: [embed_dim].
        fan_in = in_chans * patch_size * patch_size
        bound = 1.0 / jnp.sqrt(fan_in)
        self.weight = jax.random.uniform(
            kw, (embed_dim, in_chans, patch_size, patch_size),
            minval=-bound, maxval=bound, dtype=dtype)
        self.bias = jax.random.uniform(
            kb, (embed_dim,), minval=-bound, maxval=bound, dtype=dtype)

        # Precompute GEMM operands once:
        #   [E, C, ph, pw] -> [K, E] in (c, kh, kw) column order, then zero-pad
        #   K and E up to multiples of 128 (lane-dense unmasked stores, whole
        #   MXU passes).  Bias kept f32 (added on the f32 accumulator).
        K = fan_in
        Kp = _round_up(K, 128)
        Ep = _round_up(embed_dim, 128)
        w2d = jnp.transpose(self.weight.reshape(embed_dim, K))          # [K, E]
        w2d = jnp.pad(w2d, ((0, Kp - K), (0, Ep - embed_dim)))
        self.w2d = w2d.astype(compute_dtype if compute_dtype is not None else dtype)
        b2d = self.bias.reshape(1, embed_dim).astype(jnp.float32)
        self.b2d = jnp.pad(b2d, ((0, 0), (0, Ep - embed_dim)))

    def __call__(self, x):
        B, C, H, W = x.shape
        assert (H, W) == self.img_size and C == self.in_chans
        return _patch_embed_forward(
            x, self.w2d, self.b2d,
            patch_size=self.patch_size[0],
            embed_dim=self.embed_dim,
            compute_dtype=self.compute_dtype,
            out_dtype=self.out_dtype,
        )


# --------------------------------- main ------------------------------------ #
if __name__ == "__main__":
    key = jax.random.PRNGKey(0)
    k_in, k_params = jax.random.split(key)

    # Small shapes consistent with the module: B=2, C=4, 16x16 image, 8x8 patch.
    B, C, H, W = 2, 4, 16, 16
    patch, embed = 8, 128
    x = jax.random.normal(k_in, (B, C, H, W), dtype=jnp.float32)

    def conv_ref(xr, wr, br):
        r = jax.lax.conv_general_dilated(
            xr, wr, window_strides=(patch, patch), padding="VALID",
            dimension_numbers=("NCHW", "OIHW", "NCHW"))
        r = r + br.reshape(1, embed, 1, 1)
        return jnp.transpose(r.reshape(B, embed, -1), (0, 2, 1))

    # --- default bf16 compute path (f32 accumulate, f32 output) -------------
    mod = PatchEmbedPallas(img_size=H, patch_size=patch, in_chans=C,
                           embed_dim=embed, key=k_params)
    out = jax.block_until_ready(mod(x))
    assert out.shape == (B, (H // patch) * (W // patch), embed), out.shape
    # Reference with bf16-rounded operands (only accumulation order differs).
    ref_bf16 = conv_ref(
        x.astype(jnp.bfloat16).astype(jnp.float32),
        mod.weight.astype(jnp.bfloat16).astype(jnp.float32),
        mod.bias)
    assert jnp.allclose(out, ref_bf16, atol=1e-2, rtol=1e-2), "bf16 path mismatch"

    # --- exact f32 path matches nn.Conv2d numerics ---------------------------
    mod_f32 = PatchEmbedPallas(img_size=H, patch_size=patch, in_chans=C,
                               embed_dim=embed, key=k_params,
                               compute_dtype=jnp.float32)
    out_f32 = jax.block_until_ready(mod_f32(x))
    ref_f32 = conv_ref(x, mod_f32.weight, mod_f32.bias)
    assert jnp.allclose(out_f32, ref_f32, atol=1e-4, rtol=1e-4), "f32 path mismatch"

    print("KERNEL_OK")
</pallas_src>

<mosaic_0001>
module attributes {stable_mosaic.version = 11 : i64} {
  func.func @_patch_embed_kernel(%arg0: i32, %arg1: memref<16x256xbf16, #tpu.memory_space<vmem>>, %arg2: memref<256x128xbf16, #tpu.memory_space<vmem>>, %arg3: memref<1x128xf32, #tpu.memory_space<vmem>>, %arg4: memref<16x128xf32, #tpu.memory_space<vmem>>) attributes {dimension_semantics = [#tpu.dimension_semantics<parallel>], iteration_bounds = array<i64: 1>, scalar_prefetch = 0 : i64, scratch_operands = 0 : i64, tpu.core_type = #tpu.core_type<tc>, window_params = [{transform_indices = @transform_0, window_bounds = array<i64: 16, 256>}, {pipeline_mode = #tpu.pipeline_mode<synchronous>, transform_indices = @transform_1, window_bounds = array<i64: 256, 128>}, {pipeline_mode = #tpu.pipeline_mode<synchronous>, transform_indices = @transform_2, window_bounds = array<i64: 1, 128>}, {transform_indices = @transform_3, window_bounds = array<i64: 16, 128>}]} {
    %c0 = arith.constant 0 : index
    %c0_0 = arith.constant 0 : index
    %0 = vector.load %arg1[%c0, %c0_0] : memref<16x256xbf16, #tpu.memory_space<vmem>>, vector<16x256xbf16>
    %c0_1 = arith.constant 0 : index
    %c0_2 = arith.constant 0 : index
    %1 = vector.load %arg2[%c0_1, %c0_2] : memref<256x128xbf16, #tpu.memory_space<vmem>>, vector<256x128xbf16>
    %cst = arith.constant dense<0.000000e+00> : vector<16x128xf32>
    %2 = tpu.matmul %0, %1, %cst {dimension_numbers = #tpu.dot_dimension_numbers<[1], [0], [0], [1], [0, 0, 1, 1], [], []>} : vector<16x256xbf16>, vector<256x128xbf16>, vector<16x128xf32> -> vector<16x128xf32>
    %c0_3 = arith.constant 0 : index
    %c0_4 = arith.constant 0 : index
    %3 = vector.load %arg3[%c0_3, %c0_4] : memref<1x128xf32, #tpu.memory_space<vmem>>, vector<1x128xf32>
    %4 = vector.broadcast %3 : vector<1x128xf32> to vector<16x128xf32>
    %5 = arith.addf %2, %4 : vector<16x128xf32>
    %c0_5 = arith.constant 0 : index
    %c0_6 = arith.constant 0 : index
    %6 = vector.load %arg4[%c0_5, %c0_6] : memref<16x128xf32, #tpu.memory_space<vmem>>, vector<16x128xf32>
    tpu.vector_store %arg4[%c0_5, %c0_6], %5 {strides = array<i32>} : memref<16x128xf32, #tpu.memory_space<vmem>>, vector<16x128xf32>,
    return
  }
  func.func @transform_0(%arg0: i32) -> (i32, i32) {
    %c0_i32 = arith.constant 0 : i32
    %c0_i32_0 = arith.constant 0 : i32
    return %arg0, %c0_i32 : i32, i32
  }
  func.func @transform_1(%arg0: i32) -> (i32, i32) {
    %c0_i32 = arith.constant 0 : i32
    %c0_i32_0 = arith.constant 0 : i32
    %c0_i32_1 = arith.constant 0 : i32
    return %c0_i32, %c0_i32_0 : i32, i32
  }
  func.func @transform_2(%arg0: i32) -> (i32, i32) {
    %c0_i32 = arith.constant 0 : i32
    %c0_i32_0 = arith.constant 0 : i32
    %c0_i32_1 = arith.constant 0 : i32
    return %c0_i32, %c0_i32_0 : i32, i32
  }
  func.func @transform_3(%arg0: i32) -> (i32, i32) {
    %c0_i32 = arith.constant 0 : i32
    %c0_i32_0 = arith.constant 0 : i32
    return %arg0, %c0_i32 : i32, i32
  }
}

</mosaic_0001>

<llo_original>
// kernel: _patch_embed_forward.2
$region0: #{_patch_embed_forward.2}
  #allocation0 [shape = 'u32[]', space=smem, size = 0x4, offset = 0x4, fixed_abs, tag = 'smem constant byte address 0x4 - core index']
  #allocation1 [shape = 'u32[144,128]{1,0:T(1,128)}', space=vmem, size = 0x12000, scoped, tag = 'internal scratch']
  #allocation2 [shape = 'u32[2048]{0}', space=vmem, size = 0x2000, scoped, tag = 'scoped memory for _patch_embed_forward.2']
  #allocation3 [shape = 'u32[2048]{0}', space=vmem, size = 0x2000, scoped, tag = 'scoped memory for _patch_embed_forward.2']
  #allocation4 [shape = 'u32[2048]{0}', space=vmem, size = 0x2000, scoped, tag = 'scoped memory for _patch_embed_forward.2']
  #allocation5 [shape = 'u32[2048]{0}', space=vmem, size = 0x2000, scoped, tag = 'scoped memory for _patch_embed_forward.2']
  #allocation6 [shape = 'u32[2048]{0}', space=vmem, size = 0x2000, scoped, tag = 'scoped memory for _patch_embed_forward.2']
  %s0 = inlined_call_operand.vmem [shape: bf16[256,128], index: 0, kind: input, shape index: {}]
  %s1 = inlined_call_operand.vmem [shape: f32[1,128], index: 1, kind: input, shape index: {}]
  %s2 = inlined_call_operand.vmem [shape: bf16[8,256], index: 2, kind: input, shape index: {}]
  %s3 = inlined_call_operand.<no memory space> [shape: bf16[], index: 3, kind: input, shape index: {}]
  %s4 = inlined_call_operand.vmem [shape: f32[16,128], index: 4, kind: output, shape index: {}]
  %s5 = sld [smem:[#allocation0]]
  $region22: #{_patch_embed_forward.2} parent=0
    _
  %s7 = ssub.s32 1, %s5
  %s8 = scalar_select 0, %s7, %s5
  %v9 = vstv %s3
  %v10 = vunpack.i.l.bf16 %v9
  %v12 = vunpack.i.h.bf16 %v9
  $region1: #{_patch_embed_forward.2} parent=0
    #allocation7 [shape = 'u8[8192]{0}', space=vmem, size = 0x2000, dematerialized = true, scoped, tag = 'FusionAdapter Buffer %fusion.1 = bf16[16,256]{1,0:T(8,128)(2,1)} fusion(%param_2.1, %param_3), kind=kLoop, calls=%fused_computation.2.clone, metadata={op_name="jit(_patch_embed_forward)/jit(_pad)/pad" stack_frame_id=11}']
    // Predicated region
    $region2: #{_patch_embed_forward.2} parent=1 // pred_check
      _
    $region3: #{_patch_embed_forward.2} parent=1 // pred_check_branch
      %15 = sbr.rel (0) target = $region5
    $region4: #{_patch_embed_forward.2} parent=1 // pred_region
      _
    $region5: #{_patch_embed_forward.2} parent=1 // pred_fallthru
      _
    // Predicated region
    $region6: #{_patch_embed_forward.2} parent=1 // pred_check
      _
    $region7: #{_patch_embed_forward.2} parent=1 // pred_check_branch
      %17 = sbr.rel (0) target = $region9
    $region8: #{_patch_embed_forward.2} parent=1 // pred_region
      _
    $region9: #{_patch_embed_forward.2} parent=1 // pred_fallthru
      _
    // Predicated region
    $region10: #{_patch_embed_forward.2} parent=1 // pred_check
      _
    $region11: #{_patch_embed_forward.2} parent=1 // pred_check_branch
      %19 = sbr.rel (0) target = $region13
    $region12: #{_patch_embed_forward.2} parent=1 // pred_region
      _
    $region13: #{_patch_embed_forward.2} parent=1 // pred_fallthru
      _
    %s21 = sor.u32 255, 127
    %s22 = sand.u32 %s21, 85
    %s23 = sshrl.u32 %s22, 1
    %s24 = sor.u32 %s22, %s23
    %s25 = sand.u32 51, %s24
    %s26 = sshrl.u32 %s25, 2
    %s27 = sor.u32 %s25, %s26
    %s28 = sand.u32 15, %s27
    %v29 = vld [vmem:[%s2] sm:%s28]
    %v30 = vunpack.c.l.bf16 %v29
    %v31 = vunpack.c.h.bf16 %v29
    %v32 = vpack.c.bf16 0.0, %v30
    %34 = vst [vmem:[#allocation7] sm:$0xf] %v32
    %s35 = scalar_lea.vmem %s2, 4
    %s37 = sor.u32 255, 127
    %s38 = sand.u32 %s37, 85
    %s39 = sshrl.u32 %s38, 1
    %s40 = sor.u32 %s38, %s39
    %s41 = sand.u32 51, %s40
    %s42 = sshrl.u32 %s41, 2
    %s43 = sor.u32 %s41, %s42
    %s44 = sand.u32 15, %s43
    %v45 = vld [vmem:[%s35] sm:%s44]
    %v46 = vunpack.c.l.bf16 %v45
    %v47 = vunpack.c.h.bf16 %v45
    %s48 = scalar_lea.vmem [#allocation7], 4
    %v49 = vpack.c.bf16 0.0, %v46
    %51 = vst [vmem:[%s48] sm:$0xf] %v49
    %s52 = scalar_lea.vmem [#allocation7], 8
    %v53 = vpack.c.bf16 0.0, %v10
    %55 = vst [vmem:[%s52] sm:$0xf] %v53
    %s56 = scalar_lea.vmem [#allocation7], 12
    %v57 = vpack.c.bf16 0.0, %v10
    %59 = vst [vmem:[%s56] sm:$0xf] %v57
    %v61 = vld [vmem:[#allocation7] sm:$0xff]
    %v62 = vld [vmem:[#allocation7 + $0x8] sm:$0xff]
    %v63 = vld [vmem:[%s0] sm:$0xf]
    %v64 = vld [vmem:[%s0 + $0x4] sm:$0xf]
    %v65 = vld [vmem:[%s0 + $0x8] sm:$0xf]
    %v66 = vld [vmem:[%s0 + $0xc] sm:$0xf]
    %v67 = vld [vmem:[%s0 + $0x10] sm:$0xf]
    %v68 = vld [vmem:[%s0 + $0x14] sm:$0xf]
    %v69 = vld [vmem:[%s0 + $0x18] sm:$0xf]
    %v70 = vld [vmem:[%s0 + $0x1c] sm:$0xf]
    %v71 = vld [vmem:[%s0 + $0x20] sm:$0xf]
    %v72 = vld [vmem:[%s0 + $0x24] sm:$0xf]
    %v73 = vld [vmem:[%s0 + $0x28] sm:$0xf]
    %v74 = vld [vmem:[%s0 + $0x2c] sm:$0xf]
    %v75 = vld [vmem:[%s0 + $0x30] sm:$0xf]
    %v76 = vld [vmem:[%s0 + $0x34] sm:$0xf]
    %v77 = vld [vmem:[%s0 + $0x38] sm:$0xf]
    %v78 = vld [vmem:[%s0 + $0x3c] sm:$0xf]
    %v79 = vld [vmem:[%s0 + $0x40] sm:$0xf]
    %v80 = vld [vmem:[%s0 + $0x44] sm:$0xf]
    %v81 = vld [vmem:[%s0 + $0x48] sm:$0xf]
    %v82 = vld [vmem:[%s0 + $0x4c] sm:$0xf]
    %v83 = vld [vmem:[%s0 + $0x50] sm:$0xf]
    %v84 = vld [vmem:[%s0 + $0x54] sm:$0xf]
    %v85 = vld [vmem:[%s0 + $0x58] sm:$0xf]
    %v86 = vld [vmem:[%s0 + $0x5c] sm:$0xf]
    %v87 = vld [vmem:[%s0 + $0x60] sm:$0xf]
    %v88 = vld [vmem:[%s0 + $0x64] sm:$0xf]
    %v89 = vld [vmem:[%s0 + $0x68] sm:$0xf]
    %v90 = vld [vmem:[%s0 + $0x6c] sm:$0xf]
    %v91 = vld [vmem:[%s0 + $0x70] sm:$0xf]
    %v92 = vld [vmem:[%s0 + $0x74] sm:$0xf]
    %v93 = vld [vmem:[%s0 + $0x78] sm:$0xf]
    %v94 = vld [vmem:[%s0 + $0x7c] sm:$0xf]
    %v95 = vld [vmem:[%s1] sm:$0x1]
    %v97 = vlaneseq
    %v98 = vshrl.u32 %v97, 7
    %v99 = vsub.s32 0, %v98
    %v100 = vrot.slane %v95, %v99
    %v104 = vunpack.c.l.b16 %v61
    %v105 = vunpack.c.h.b16 %v61
    %v106 = vunpack.c.l.b16 %v62
    %v107 = vunpack.c.h.b16 %v62
    %v108 = vpack.c.b16 %v106, %v104
    %v109 = vpack.c.b16 %v107, %v105
    %v144 = vunpack.c.l.b16 %v63
    %v145 = vunpack.c.l.b16 %v64
    %v146 = vunpack.c.l.b16 %v65
    %v147 = vunpack.c.l.b16 %v66
    %v148 = vunpack.c.l.b16 %v67
    %v149 = vunpack.c.l.b16 %v68
    %v150 = vunpack.c.l.b16 %v69
    %v151 = vunpack.c.l.b16 %v70
    %v152 = vunpack.c.l.b16 %v71
    %v153 = vunpack.c.l.b16 %v72
    %v154 = vunpack.c.l.b16 %v73
    %v155 = vunpack.c.l.b16 %v74
    %v156 = vunpack.c.l.b16 %v75
    %v157 = vunpack.c.l.b16 %v76
    %v158 = vunpack.c.l.b16 %v77
    %v159 = vunpack.c.l.b16 %v78
    %v160 = vunpack.c.l.b16 %v79
    %v161 = vunpack.c.l.b16 %v80
    %v162 = vunpack.c.l.b16 %v81
    %v163 = vunpack.c.l.b16 %v82
    %v164 = vunpack.c.l.b16 %v83
    %v165 = vunpack.c.l.b16 %v84
    %v166 = vunpack.c.l.b16 %v85
    %v167 = vunpack.c.l.b16 %v86
    %v168 = vunpack.c.l.b16 %v87
    %v169 = vunpack.c.l.b16 %v88
    %v170 = vunpack.c.l.b16 %v89
    %v171 = vunpack.c.l.b16 %v90
    %v172 = vunpack.c.l.b16 %v91
    %v173 = vunpack.c.l.b16 %v92
    %v174 = vunpack.c.l.b16 %v93
    %v175 = vunpack.c.l.b16 %v94
    %v176 = vpack.c.b16 %v145, %v144
    %v177 = vpack.c.b16 %v147, %v146
    %v178 = vpack.c.b16 %v149, %v148
    %v179 = vpack.c.b16 %v151, %v150
    %v180 = vpack.c.b16 %v153, %v152
    %v181 = vpack.c.b16 %v155, %v154
    %v182 = vpack.c.b16 %v157, %v156
    %v183 = vpack.c.b16 %v159, %v158
    %v184 = vpack.c.b16 %v161, %v160
    %v185 = vpack.c.b16 %v163, %v162
    %v186 = vpack.c.b16 %v165, %v164
    %v187 = vpack.c.b16 %v167, %v166
    %v188 = vpack.c.b16 %v169, %v168
    %v189 = vpack.c.b16 %v171, %v170
    %v190 = vpack.c.b16 %v173, %v172
    %v191 = vpack.c.b16 %v175, %v174
    %208 = vmatprep.subr.bf16.mxu0 0
    %209 = vmatpush1.bf16.msra.mxu0 %v176
    %210 = vmatprep.subr.bf16.mxu0 0
    %211 = vmatpush1.bf16.msra.mxu0 %v177
    %212 = vmatprep.subr.bf16.mxu0 0
    %213 = vmatpush1.bf16.msra.mxu0 %v178
    %214 = vmatprep.subr.bf16.mxu0 0
    %215 = vmatpush1.bf16.msra.mxu0 %v179
    %216 = vmatprep.subr.bf16.mxu0 0
    %217 = vmatpush1.bf16.msra.mxu0 %v180
    %218 = vmatprep.subr.bf16.mxu0 0
    %219 = vmatpush1.bf16.msra.mxu0 %v181
    %220 = vmatprep.subr.bf16.mxu0 0
    %221 = vmatpush1.bf16.msra.mxu0 %v182
    %222 = vmatprep.subr.bf16.mxu0 0
    %223 = vmatpush1.bf16.msra.mxu0 %v183
    %224 = vmatprep.subr.bf16.mxu0 0
    %225 = vmatpush1.bf16.msra.mxu0 %v184
    %226 = vmatprep.subr.bf16.mxu0 0
    %227 = vmatpush1.bf16.msra.mxu0 %v185
    %228 = vmatprep.subr.bf16.mxu0 0
    %229 = vmatpush1.bf16.msra.mxu0 %v186
    %230 = vmatprep.subr.bf16.mxu0 0
    %231 = vmatpush1.bf16.msra.mxu0 %v187
    %232 = vmatprep.subr.bf16.mxu0 0
    %233 = vmatpush1.bf16.msra.mxu0 %v188
    %234 = vmatprep.subr.bf16.mxu0 0
    %235 = vmatpush1.bf16.msra.mxu0 %v189
    %236 = vmatprep.subr.bf16.mxu0 0
    %237 = vmatpush1.bf16.msra.mxu0 %v190
    %238 = vmatprep.subr.bf16.mxu0 0
    %239 = vmatpush1.bf16.msra.mxu0 %v191
    %240 = vmatprep.mubr.bf16.mxu0 %v109
    %241 = vmatmul.mubr.bf16.gmra.mrb[0].mxu0 %v108
    %v242 = vpop.f32.mrb[0].mxu0
    %v243 = vadd.f32 %v100, %v242
    %v244 = vpop.f32.mrb[0].mxu0
    %v245 = vpop.f32.mrb[0].mxu0
    %v246 = vadd.f32 %v100, %v245
    %v247 = vpop.f32.mrb[0].mxu0
    %248 = vdwg.mxu0
    %249 = vst [vmem:[%s4] sm:$0xff] %v243
    %250 = vst [vmem:[%s4 + $0x8] sm:$0xff] %v246
    // Predicated region
    $region14: #{_patch_embed_forward.2} parent=1 // pred_check
      _
    $region15: #{_patch_embed_forward.2} parent=1 // pred_check_branch
      %252 = sbr.rel (0) target = $region17
    $region16: #{_patch_embed_forward.2} parent=1 // pred_region
      _
    $region17: #{_patch_embed_forward.2} parent=1 // pred_fallthru
      _
    // Predicated region
    $region18: #{_patch_embed_forward.2} parent=1 // pred_check
      _
    $region19: #{_patch_embed_forward.2} parent=1 // pred_check_branch
      %254 = sbr.rel (0) target = $region21
    $region20: #{_patch_embed_forward.2} parent=1 // pred_region
      _
    $region21: #{_patch_embed_forward.2} parent=1 // pred_fallthru
      _

</llo_original>
